<compile_context>
chip_gen: v7x
topology: tpu7x:2x2x1
jax: 0.10.0
libtpu: 0.0.40
codegen_flags: <defaults>
</compile_context>

<pallas_src>
import jax
import jax.numpy as jnp
from jax import lax
from jax.experimental import pallas as pl
from jax.experimental.pallas import tpu as pltpu


def mlp1d_forward(x_ncl, w1, w2, gamma, beta, *, eps=1e-5,
                  compute_dtype=jnp.bfloat16, out_dtype=None,
                  target_lane_elems=32768,
                  vmem_limit_bytes=48 * 1024 * 1024):
    """BYOL-neck MLP1D forward with training-mode BatchNorm batch statistics.

    x_ncl: (N, C_in, L); w1: (hid, C_in); w2: (C_out, hid); gamma/beta: (hid,).
    """
    N, C_in, L = x_ncl.shape
    hid = w1.shape[0]
    C_out = w2.shape[0]
    out_dtype = x_ncl.dtype if out_dtype is None else out_dtype

    # ---- tiling: MiB-scale lane blocks; block over N when L is small -------
    if L > target_lane_elems:
        tl = (target_lane_elems // 128) * 128       # lane tile: multiple of 128
    else:
        tl = L                                      # full-dim lane block
    num_l = int(pl.cdiv(L, tl))
    needs_mask = (L % tl) != 0                      # ragged tail on the L axis

    bn = 1
    if tl == L:
        # Small-L regime: grow the block over N to keep per-step bytes large,
        # but keep >= 2 grid blocks so v7x's two TensorCores both get work.
        for d in range(1, N + 1):
            if N % d == 0 and d * tl <= target_lane_elems and (N // d) * num_l >= 2:
                bn = d
    nb = N // bn
    grid = (nb, num_l)

    w1c = w1.astype(compute_dtype)
    w2c = w2.astype(compute_dtype)

    cparams = pltpu.CompilerParams(
        dimension_semantics=("parallel", "parallel"),
        vmem_limit_bytes=vmem_limit_bytes,
    )

    # ------------------------------------------------------------------
    # Pass 1 (stats): per grid block emit channel sum (C_in,1) and Gram
    # matrix G = sum_l x x^T (C_in,C_in).  H never exists in this pass.
    # ------------------------------------------------------------------
    def stats_kernel(x_ref, sum_ref, gram_ref):
        l_idx = pl.program_id(1)
        acc_s = jnp.zeros((C_in, 1), jnp.float32)
        acc_g = jnp.zeros((C_in, C_in), jnp.float32)
        for b in range(bn):                          # static unroll, bn is small
            xb = x_ref[b]                            # (C_in, tl), input dtype
            if needs_mask:
                # Boundary-block columns beyond L hold unspecified data; the
                # select (not a multiply) also neutralizes NaN/Inf garbage.
                lane = lax.broadcasted_iota(jnp.int32, (C_in, tl), 1) + l_idx * tl
                xb = jnp.where(lane < L, xb, jnp.zeros_like(xb))
            xc = xb.astype(compute_dtype)            # in-kernel cast (no wrapper copy)
            acc_s = acc_s + jnp.sum(xc.astype(jnp.float32), axis=1, keepdims=True)
            # Contract the lane axis of both operands (same pattern as QK^T).
            acc_g = acc_g + jnp.einsum("cl,dl->cd", xc, xc,
                                       preferred_element_type=jnp.float32)
        sum_ref[0, 0] = acc_s
        gram_ref[0, 0] = acc_g

    sums, grams = pl.pallas_call(
        stats_kernel,
        out_shape=(
            jax.ShapeDtypeStruct((nb, num_l, C_in, 1), jnp.float32),
            jax.ShapeDtypeStruct((nb, num_l, C_in, C_in), jnp.float32),
        ),
        grid_spec=pltpu.PrefetchScalarGridSpec(
            num_scalar_prefetch=0,
            grid=grid,
            in_specs=[pl.BlockSpec((bn, C_in, tl), lambda n, l: (n, 0, l))],
            out_specs=[
                pl.BlockSpec((1, 1, C_in, 1), lambda n, l: (n, l, 0, 0)),
                pl.BlockSpec((1, 1, C_in, C_in), lambda n, l: (n, l, 0, 0)),
            ],
        ),
        compiler_params=cparams,
    )(x_ncl)

    # ---- tiny glue: reduce partials, fold BN scale into w1 -----------------
    count = float(N * L)                             # true count (tail was masked)
    w1f = w1c.astype(jnp.float32)                    # same rounding the MXU sees
    sum_x = jnp.sum(sums, axis=(0, 1)).reshape(C_in)
    G = jnp.sum(grams, axis=(0, 1))                  # (C_in, C_in)
    mean = (w1f @ sum_x) / count                     # (hid,)
    ex2 = jnp.einsum("hc,cd,hd->h", w1f, G, w1f) / count
    # TODO(synk): E[h^2]-mean^2 in f32 can cancel for large-mean activations;
    # use a shifted/two-pass variance if this feeds training-grade numerics.
    var = jnp.maximum(ex2 - mean * mean, 0.0)        # biased batch variance
    inv = gamma.astype(jnp.float32) / jnp.sqrt(var + eps)        # (hid,)
    w1_scaled = (inv[:, None] * w1f).astype(compute_dtype)       # BN scale folded into conv1
    shift = (beta.astype(jnp.float32) - mean * inv).reshape(hid, 1)

    # ------------------------------------------------------------------
    # Pass 2: recompute H with the BN-scaled conv1 weight, add shift, ReLU,
    # second 1x1 conv.  Ragged output tail is masked by Pallas on store.
    # ------------------------------------------------------------------
    def bn_relu_conv2_kernel(x_ref, w1s_ref, w2_ref, shift_ref, o_ref):
        for b in range(bn):                          # static unroll
            xc = x_ref[b].astype(compute_dtype)      # (C_in, tl), in-kernel cast
            h = jnp.dot(w1s_ref[...], xc,
                        preferred_element_type=jnp.float32)       # (hid, tl)
            y = jnp.maximum(h + shift_ref[...], 0.0)               # BN shift + ReLU
            o = jnp.dot(w2_ref[...], y.astype(compute_dtype),
                        preferred_element_type=jnp.float32)       # (C_out, tl)
            o_ref[b] = o.astype(o_ref.dtype)

    out = pl.pallas_call(
        bn_relu_conv2_kernel,
        out_shape=jax.ShapeDtypeStruct((N, C_out, L), out_dtype),
        grid_spec=pltpu.PrefetchScalarGridSpec(
            num_scalar_prefetch=0,
            grid=grid,
            in_specs=[
                pl.BlockSpec((bn, C_in, tl), lambda n, l: (n, 0, l)),
                pl.BlockSpec((hid, C_in), lambda n, l: (0, 0)),
                pl.BlockSpec((C_out, hid), lambda n, l: (0, 0)),
                pl.BlockSpec((hid, 1), lambda n, l: (0, 0)),
            ],
            out_specs=pl.BlockSpec((bn, C_out, tl), lambda n, l: (n, 0, l)),
        ),
        compiler_params=cparams,
    )(x_ncl, w1_scaled, w2c, shift)

    return out


def mlp1d_reference(x_ncl, w1, w2, gamma, beta, eps=1e-5):
    """Plain-JAX reference matching the PyTorch training-mode forward."""
    h = jnp.einsum("hc,ncl->nhl", w1, x_ncl)
    mean = h.mean(axis=(0, 2), keepdims=True)
    var = ((h - mean) ** 2).mean(axis=(0, 2), keepdims=True)  # biased
    h = (h - mean) / jnp.sqrt(var + eps)
    h = h * gamma.reshape(1, -1, 1) + beta.reshape(1, -1, 1)
    h = jnp.maximum(h, 0.0)
    return jnp.einsum("oh,nhl->nol", w2, h)


if __name__ == "__main__":
    hid, C_out = 32, 8
    key = jax.random.PRNGKey(0)
    kx, k1, k2, kx2, kx3 = jax.random.split(key, 5)

    # Conv1d weights (kernel size 1, no bias): (out_ch, in_ch); BN default affine.
    w1 = jax.random.normal(k1, (hid, 4), dtype=jnp.float32) * 0.1
    w2 = jax.random.normal(k2, (C_out, hid), dtype=jnp.float32) * 0.1
    gamma = jnp.ones((hid,), dtype=jnp.float32)
    beta = jnp.zeros((hid,), dtype=jnp.float32)

    # --- test A: small shapes consistent with MLP1D(in=4, hid=32, out=8) ----
    N, C_in, L = 2, 4, 16
    x = jax.random.normal(kx, (N, C_in, L), dtype=jnp.float32)
    ref = mlp1d_reference(x, w1, w2, gamma, beta)

    out_f32 = jax.block_until_ready(
        mlp1d_forward(x, w1, w2, gamma, beta, compute_dtype=jnp.float32))
    assert out_f32.shape == (N, C_out, L)
    assert jnp.allclose(out_f32, ref, atol=1e-4, rtol=1e-4)

    out_bf16 = jax.block_until_ready(
        mlp1d_forward(x, w1, w2, gamma, beta, compute_dtype=jnp.bfloat16))
    assert out_bf16.shape == (N, C_out, L)
    assert jnp.allclose(out_bf16, ref, atol=7e-2, rtol=7e-2)

    # --- test B: ragged L (exercises in-kernel tail masking, no wrapper pad) -
    Nb, Lb = 4, 300
    xb = jax.random.normal(kx2, (Nb, 4, Lb), dtype=jnp.float32)
    refb = mlp1d_reference(xb, w1, w2, gamma, beta)
    outb = jax.block_until_ready(
        mlp1d_forward(xb, w1, w2, gamma, beta, compute_dtype=jnp.float32,
                      target_lane_elems=128))
    assert outb.shape == (Nb, C_out, Lb)
    assert jnp.allclose(outb, refb, atol=1e-4, rtol=1e-4)

    # --- test C: small L, multi-sample blocks (bn > 1 path) -----------------
    Nc, Lc = 4, 8
    xc = jax.random.normal(kx3, (Nc, 4, Lc), dtype=jnp.float32)
    refc = mlp1d_reference(xc, w1, w2, gamma, beta)
    outc = jax.block_until_ready(
        mlp1d_forward(xc, w1, w2, gamma, beta, compute_dtype=jnp.float32))
    assert outc.shape == (Nc, C_out, Lc)
    assert jnp.allclose(outc, refc, atol=1e-4, rtol=1e-4)

    print("KERNEL_OK")
</pallas_src>

<mosaic_0001>
module attributes {stable_mosaic.version = 11 : i64} {
  func.func @stats_kernel(%arg0: i32, %arg1: i32, %arg2: memref<1x4x16xf32, #tpu.memory_space<vmem>>, %arg3: memref<1x1x4x1xf32, #tpu.memory_space<vmem>>, %arg4: memref<1x1x4x4xf32, #tpu.memory_space<vmem>>) attributes {dimension_semantics = [#tpu.dimension_semantics<parallel>, #tpu.dimension_semantics<parallel>], iteration_bounds = array<i64: 2, 1>, scalar_prefetch = 0 : i64, scratch_operands = 0 : i64, tpu.core_type = #tpu.core_type<tc>, window_params = [{transform_indices = @transform_0, window_bounds = array<i64: 1, 4, 16>}, {transform_indices = @transform_1, window_bounds = array<i64: 1, 1, 4, 1>}, {transform_indices = @transform_2, window_bounds = array<i64: 1, 1, 4, 4>}]} {
    %cst = arith.constant 0.000000e+00 : f32
    %0 = vector.broadcast %cst : f32 to vector<4x1xf32>
    %cst_0 = arith.constant 0.000000e+00 : f32
    %1 = vector.broadcast %cst_0 : f32 to vector<4x4xf32>
    %c0 = arith.constant 0 : index
    %c0_1 = arith.constant 0 : index
    %c0_2 = arith.constant 0 : index
    %2 = vector.load %arg2[%c0, %c0_1, %c0_2] : memref<1x4x16xf32, #tpu.memory_space<vmem>>, vector<1x4x16xf32>
    %3 = vector.shape_cast %2 : vector<1x4x16xf32> to vector<4x16xf32>
    %cst_3 = arith.constant dense<0.000000e+00> : vector<4xf32>
    %4 = vector.multi_reduction <add>, %3, %cst_3 [1] : vector<4x16xf32> to vector<4xf32>
    %5 = vector.shape_cast %4 : vector<4xf32> to vector<4x1xf32>
    %6 = arith.addf %0, %5 : vector<4x1xf32>
    "tpu.trace_start"() <{level = 10 : i32, message = "cl,dl->cd"}> : () -> ()
    %cst_4 = arith.constant dense<0.000000e+00> : vector<4x4xf32>
    %7 = tpu.matmul %3, %3, %cst_4 {dimension_numbers = #tpu.dot_dimension_numbers<[1], [1], [0], [0], [0, 0, 1, 0], [], []>} : vector<4x16xf32>, vector<4x16xf32>, vector<4x4xf32> -> vector<4x4xf32>
    "tpu.trace_stop"() : () -> ()
    %8 = arith.addf %1, %7 : vector<4x4xf32>
    %c0_5 = arith.constant 0 : index
    %c0_6 = arith.constant 0 : index
    %c0_7 = arith.constant 0 : index
    %c0_8 = arith.constant 0 : index
    %9 = vector.load %arg3[%c0_5, %c0_6, %c0_7, %c0_8] : memref<1x1x4x1xf32, #tpu.memory_space<vmem>>, vector<1x1x4x1xf32>
    %10 = vector.shape_cast %9 : vector<1x1x4x1xf32> to vector<4x1xf32>
    %11 = vector.shape_cast %6 : vector<4x1xf32> to vector<1x1x4x1xf32>
    tpu.vector_store %arg3[%c0_5, %c0_6, %c0_7, %c0_8], %11 {strides = array<i32>} : memref<1x1x4x1xf32, #tpu.memory_space<vmem>>, vector<1x1x4x1xf32>,
    %c0_9 = arith.constant 0 : index
    %c0_10 = arith.constant 0 : index
    %c0_11 = arith.constant 0 : index
    %c0_12 = arith.constant 0 : index
    %12 = vector.load %arg4[%c0_9, %c0_10, %c0_11, %c0_12] : memref<1x1x4x4xf32, #tpu.memory_space<vmem>>, vector<1x1x4x4xf32>
    %13 = vector.shape_cast %12 : vector<1x1x4x4xf32> to vector<4x4xf32>
    %14 = vector.shape_cast %8 : vector<4x4xf32> to vector<1x1x4x4xf32>
    tpu.vector_store %arg4[%c0_9, %c0_10, %c0_11, %c0_12], %14 {strides = array<i32>} : memref<1x1x4x4xf32, #tpu.memory_space<vmem>>, vector<1x1x4x4xf32>,
    return
  }
  func.func @transform_0(%arg0: i32, %arg1: i32) -> (i32, i32, i32) {
    %c0_i32 = arith.constant 0 : i32
    %c0_i32_0 = arith.constant 0 : i32
    return %arg0, %c0_i32, %arg1 : i32, i32, i32
  }
  func.func @transform_1(%arg0: i32, %arg1: i32) -> (i32, i32, i32, i32) {
    %c0_i32 = arith.constant 0 : i32
    %c0_i32_0 = arith.constant 0 : i32
    %c0_i32_1 = arith.constant 0 : i32
    return %arg0, %arg1, %c0_i32, %c0_i32_0 : i32, i32, i32, i32
  }
  func.func @transform_2(%arg0: i32, %arg1: i32) -> (i32, i32, i32, i32) {
    %c0_i32 = arith.constant 0 : i32
    %c0_i32_0 = arith.constant 0 : i32
    %c0_i32_1 = arith.constant 0 : i32
    return %arg0, %arg1, %c0_i32, %c0_i32_0 : i32, i32, i32, i32
  }
}

</mosaic_0001>

<llo_original>
// kernel: tpu_custom_call.1
$region0: #{tpu_custom_call.1}
  #allocation0 [shape = 'u32[]', space=smem, size = 0x4, offset = 0x4, fixed_abs, tag = 'smem constant byte address 0x4 - core index']
  #allocation1 [shape = 'u32[144,128]{1,0:T(1,128)}', space=vmem, size = 0x12000, scoped, tag = 'internal scratch']
  %s0 = inlined_call_operand.hbm [shape: f32[2,4,16], index: 0, kind: input, shape index: {}]
  %s1 = inlined_call_operand.vmem [shape: f32[2,1,4,1], index: 1, kind: output, shape index: {0}]
  %s2 = inlined_call_operand.hbm [shape: f32[2,1,4,4], index: 2, kind: output, shape index: {1}]
  %3 = xla_tuple %s1, %s2
  %s4 = sld [smem:[#allocation0]]
  $region49: #{tpu_custom_call.1} parent=0
    _
  %s6 = ssub.s32 1, %s4
  %s7 = scalar_select 0, %s6, %s4
  $region1: #{tpu_custom_call.1} parent=0
    #allocation2 [shape = 'u8[4096]{0}', space=vmem, size = 0x1000, scoped, tag = 'input window, operand 0']
    #allocation3 [shape = 's32[2]{0}', space=sflag, size = 0x8, scoped, tag = 'scoped memory for tpu_custom_call.1']
    #allocation4 [shape = 's32[2]{0}', space=sflag, size = 0x8, scoped, tag = 'scoped memory for tpu_custom_call.1']
    #allocation5 [shape = 'u8[4096]{0}', space=vmem, size = 0x1000, scoped, tag = 'output window, operand 1']
    %8 = vsyncpa [#allocation3], 0
    %s9 = scalar_lea.sflag [#allocation3], 1
    %10 = vsyncpa %s9, 0
    %11 = vsyncpa [#allocation4], 0
    %s12 = scalar_lea.sflag [#allocation4], 1
    %13 = vsyncpa %s12, 0
    loop: start=0, step=1, limit=4
    $region2: #{tpu_custom_call.1} parent=1 // loop_pre_header
      _
    $region3: #{tpu_custom_call.1} parent=1 // loop_header
      %s15 = sphi 0, %s19
      %p16 = scmp.ge.s32.totalorder %s15, 4
      %s22 = sphi 0, %s34
      %s23 = sphi 0, %s30
      %s24 = sphi 0, %s22
      %s25 = sphi 0, %s23
      %s26 = sphi 0, %s24
      %s27 = sphi 0, %s25
      %s39 = sphi 0, %s41
      %s42 = sphi 0, %s39
      %s43 = sphi 0, %s42
      %s59 = sphi 0, %s43
      %s67 = sphi 0, %s69
      %s70 = sphi 0, %s67
      %s71 = sphi 0, %s70
      %s87 = sphi 0, %s71
      %s95 = sphi 0, %s97
      %s98 = sphi 0, %s95
      %s99 = sphi 0, %s98
      %s115 = sphi 0, %s99
    $region4: #{tpu_custom_call.1} parent=1 // loop_header_branch
      %18 = sbr.rel (%p16) target = $region8
    $region5: #{tpu_custom_call.1} parent=1 // loop_body
      %s20 = ssub.s32 %s15, 1
      %s21 = ssub.s32 %s15, 2
      %s28 = sadd.s32 1, %s23
      %p29 = scmp.ge.s32.totalorder %s28, 1
      %s30 = scalar_select %p29, 0, %s28
      %s31 = sadd.s32 1, %s22
      %s32 = scalar_select %p29, %s31, %s22
      %p33 = scmp.ge.s32.totalorder %s32, 2
      %s34 = scalar_select %p33, 0, %s32
      %s35 = ssub.s32 %s22, %s34
      %s36 = ssub.s32 %s23, %s30
      %s37 = sor.u32 %s35, %s36
      %p38 = scmp.eq.s32.totalorder %s37, 0
      %s40 = sadd.s32 %s39, 1
      %s41 = scalar_select %p38, %s39, %s40
      %p44 = pneg %p38
      %p45 = scmp.eq.s32.totalorder %s15, 1
      %p46 = por %p44, %p45
      %p47 = scmp.ne.s32.totalorder %s39, %s42
      %p48 = scmp.eq.s32.totalorder %s15, 0
      %p49 = por %p47, %p48
      %p50 = scmp.ne.s32.totalorder %s39, %s42
      %p51 = scmp.eq.s32.totalorder %s20, 1
      %p52 = por %p50, %p51
      %p53 = scmp.ne.s32.totalorder %s42, %s43
      %p54 = scmp.eq.s32.totalorder %s20, 0
      %p55 = por %p53, %p54
      %p56 = scmp.ne.s32.totalorder %s42, %s43
      %p57 = scmp.eq.s32.totalorder %s21, 1
      %p58 = por %p56, %p57
      %p60 = scmp.ne.s32.totalorder %s43, %s59
      %p61 = scmp.eq.s32.totalorder %s21, 0
      %p62 = por %p60, %p61
      %s63 = ssub.s32 %s22, %s34
      %s64 = ssub.s32 %s23, %s30
      %s65 = sor.u32 %s63, %s64
      %p66 = scmp.eq.s32.totalorder %s65, 0
      %s68 = sadd.s32 %s67, 1
      %s69 = scalar_select %p66, %s67, %s68
      %p72 = pneg %p66
      %p73 = scmp.eq.s32.totalorder %s15, 1
      %p74 = por %p72, %p73
      %p75 = scmp.ne.s32.totalorder %s67, %s70
      %p76 = scmp.eq.s32.totalorder %s15, 0
      %p77 = por %p75, %p76
      %p78 = scmp.ne.s32.totalorder %s67, %s70
      %p79 = scmp.eq.s32.totalorder %s20, 1
      %p80 = por %p78, %p79
      %p81 = scmp.ne.s32.totalorder %s70, %s71
      %p82 = scmp.eq.s32.totalorder %s20, 0
      %p83 = por %p81, %p82
      %p84 = scmp.ne.s32.totalorder %s70, %s71
      %p85 = scmp.eq.s32.totalorder %s21, 1
      %p86 = por %p84, %p85
      %p88 = scmp.ne.s32.totalorder %s71, %s87
      %p89 = scmp.eq.s32.totalorder %s21, 0
      %p90 = por %p88, %p89
      %s91 = ssub.s32 %s22, %s34
      %s92 = ssub.s32 %s23, %s30
      %s93 = sor.u32 %s91, %s92
      %p94 = scmp.eq.s32.totalorder %s93, 0
      %s96 = sadd.s32 %s95, 1
      %s97 = scalar_select %p94, %s95, %s96
      %p100 = pneg %p94
      %p101 = scmp.eq.s32.totalorder %s15, 1
      %p102 = por %p100, %p101
      %p103 = scmp.ne.s32.totalorder %s95, %s98
      %p104 = scmp.eq.s32.totalorder %s15, 0
      %p105 = por %p103, %p104
      %p106 = scmp.ne.s32.totalorder %s95, %s98
      %p107 = scmp.eq.s32.totalorder %s20, 1
      %p108 = por %p106, %p107
      %p109 = scmp.ne.s32.totalorder %s98, %s99
      %p110 = scmp.eq.s32.totalorder %s20, 0
      %p111 = por %p109, %p110
      %p112 = scmp.ne.s32.totalorder %s98, %s99
      %p113 = scmp.eq.s32.totalorder %s21, 1
      %p114 = por %p112, %p113
      %p116 = scmp.ne.s32.totalorder %s99, %s115
      %p117 = scmp.eq.s32.totalorder %s21, 0
      %p118 = por %p116, %p117
      %p119 = scmp.le.s32.totalorder 1, %s15
      %p120 = scmp.lt.s32.totalorder %s15, 3
      %p121 = pnand %p119, %p120
      %p122 = pneg %p121
      // Predicated region
      $region9: #{tpu_custom_call.1} parent=5 // pred_check
        _
      $region10: #{tpu_custom_call.1} parent=5 // pred_check_branch
        %124 = sbr.rel (%p121) target = $region12
      $region11: #{tpu_custom_call.1} parent=5 // pred_region
        %s125 = ssub.s32 %s15, 1
      $region12: #{tpu_custom_call.1} parent=5 // pred_fallthru
        _
      %p126 = scmp.lt.s32.totalorder %s15, 2
      // Predicated region
      $region13: #{tpu_custom_call.1} parent=5 // pred_check
        %p127 = pneg %p126
      $region14: #{tpu_custom_call.1} parent=5 // pred_check_branch
        %129 = sbr.rel (%p127) target = $region16
      $region15: #{tpu_custom_call.1} parent=5 // pred_region
        // Predicated region
        $region17: #{tpu_custom_call.1} parent=15 // pred_check
          %p130 = pneg %p49
        $region18: #{tpu_custom_call.1} parent=15 // pred_check_branch
          %132 = sbr.rel (%p130) target = $region20
        $region19: #{tpu_custom_call.1} parent=15 // pred_region
          %s133 = sand.u32 %s39, 1
          %s134 = scalar_lea.sflag [#allocation3], %s133
          %s135 = sand.u32 %s39, 1
          %s136 = smul.addr %s135, 4
          %s137 = scalar_lea.vmem [#allocation2], %s136
          %s139 = ssub.s32 64, 64
          %140 = vsyncadd %s134, %s139
          %s141 = sadd.s32 %s23, %s22
          %s142 = smul.addr %s141, 64
          %s143 = scalar_lea.hbm %s0, %s142
          %s145 = sshll.u32 %s137, 4
          %s146 = int_to_ptr.vmem [resolvable:$true] %s145
          %148 = dma.hbm_to_vmem [thread:$0]  %s143, 64, %s146, %s134
        $region20: #{tpu_custom_call.1} parent=15 // pred_fallthru
          _
      $region16: #{tpu_custom_call.1} parent=5 // pred_fallthru
        _
      %p149 = scmp.le.s32.totalorder 1, %s15
      %p150 = scmp.lt.s32.totalorder %s15, 3
      %p151 = pnand %p149, %p150
      %p152 = pneg %p151
      // Predicated region
      $region21: #{tpu_custom_call.1} parent=5 // pred_check
        _
      $region22: #{tpu_custom_call.1} parent=5 // pred_check_branch
        %154 = sbr.rel (%p151) target = $region24
      $region23: #{tpu_custom_call.1} parent=5 // pred_region
        %s155 = ssub.s32 %s15, 1
        %s156 = sand.u32 %s42, 1
        %s157 = scalar_lea.sflag [#allocation3], %s156
        %s158 = sand.u32 %s42, 1
        %s159 = smul.addr %s158, 4
        %s160 = scalar_lea.vmem [#allocation2], %s159
        // Predicated region
        $region25: #{tpu_custom_call.1} parent=23 // pred_check
          %p161 = pneg %p55
        $region26: #{tpu_custom_call.1} parent=23 // pred_check_branch
          %163 = sbr.rel (%p161) target = $region28
        $region27: #{tpu_custom_call.1} parent=23 // pred_region
          %164 = dma.done %s157, 64
        $region28: #{tpu_custom_call.1} parent=23 // pred_fallthru
          _
        %s165 = sand.u32 %s42, 1
        %s166 = scalar_lea.sflag [#allocation3], %s165
        %s167 = sand.u32 %s42, 1
        %s168 = smul.addr %s167, 4
        %s169 = scalar_lea.vmem [#allocation2], %s168
        %p170 = pneg %p55
        %p171 = pneg %p52
        %p172 = pneg %p83
        %p173 = pneg %p80
        %p174 = scmp.lt.s32.totalorder %s24, 1
        %s175 = scalar_select %p174, %s24, 1
        %p176 = scmp.lt.s32.totalorder %s25, 0
        %s177 = scalar_select %p176, %s25, 0
        %s178 = sadd.s32 %s177, %s175
        %s179 = smul.addr %s178, 4
        %s180 = scalar_lea.vmem %s1, %s179
        %p181 = pneg %p111
        %p182 = pneg %p108
        %s183 = sand.u32 %s98, 1
        %s184 = scalar_lea.sflag [#allocation4], %s183
        %s185 = sand.u32 %s98, 1
        %s186 = smul.addr %s185, 4
        %s187 = scalar_lea.vmem [#allocation5], %s186
        %p188 = scmp.lt.s32.totalorder %s24, 1
        %s189 = scalar_select %p188, %s24, 1
        %p190 = scmp.lt.s32.totalorder %s25, 0
        %s191 = scalar_select %p190, %s25, 0
        %s192 = sadd.s32 %s191, %s189
        %s193 = smul.addr %s192, 4
        %s194 = scalar_lea.vmem %s1, %s193
        %v195 = vld [vmem:[%s160] sm:$0xf]
        %vm196 = vcmask 125952
        %v197 = vsel %vm196, %v195, 0.0
        %198 = vadd.xlane.f32.xlu0 %v197
        %v199 = vpop.xlane.xlu0 %198
        %v200 = vadd.f32 %v199, 0.0
        %vm201 = vcmask 130048
        %v203 = vsel %vm201, %v195, 0
        %205 = vmatprep.subr.mxu0 0.0
        %206 = vmatpush1.xpose.msra.mxu0 %v203
        %207 = vmatprep.subr.mxu0 0.0
        %208 = vmatpush1.xpose.msra.mxu0 0.0
        %209 = vmatprep.subr.mxu0 0.0
        %210 = vmatpush1.xpose.msra.mxu0 0.0
        %211 = vmatprep.subr.mxu0 0.0
        %212 = vmatpush1.xpose.msra.mxu0 0.0
        %213 = vmatprep.subr.mxu0 0.0
        %214 = vmatpush1.xpose.msra.mxu0 0.0
        %215 = vmatprep.subr.mxu0 0.0
        %216 = vmatpush1.xpose.msra.mxu0 0.0
        %217 = vmatprep.subr.mxu0 0.0
        %218 = vmatpush1.xpose.msra.mxu0 0.0
        %219 = vmatprep.subr.mxu0 0.0
        %220 = vmatpush1.xpose.msra.mxu0 0.0
        %221 = vmatprep.subr.mxu0 0.0
        %222 = vmatpush1.xpose.msra.mxu0 0.0
        %223 = vmatprep.subr.mxu0 0.0
        %224 = vmatpush1.xpose.msra.mxu0 0.0
        %225 = vmatprep.subr.mxu0 0.0
        %226 = vmatpush1.xpose.msra.mxu0 0.0
        %227 = vmatprep.subr.mxu0 0.0
        %228 = vmatpush1.xpose.msra.mxu0 0.0
        %229 = vmatprep.subr.mxu0 0.0
        %230 = vmatpush1.xpose.msra.mxu0 0.0
        %231 = vmatprep.subr.mxu0 0.0
        %232 = vmatpush1.xpose.msra.mxu0 0.0
        %233 = vmatprep.subr.mxu0 0.0
        %234 = vmatpush1.xpose.msra.mxu0 0.0
        %235 = vmatprep.subr.mxu0 0.0
        %236 = vmatpush1.xpose.msra.mxu0 0.0
        %237 = vmatprep.subr.mxu0 0.0
        %238 = vmatpush1.xpose.msra.mxu0 0.0
        %239 = vmatprep.subr.mxu0 0.0
        %240 = vmatpush1.xpose.msra.mxu0 0.0
        %241 = vmatprep.subr.mxu0 0.0
        %242 = vmatpush1.xpose.msra.mxu0 0.0
        %243 = vmatprep.subr.mxu0 0.0
        %244 = vmatpush1.xpose.msra.mxu0 0.0
        %245 = vmatprep.subr.mxu0 0.0
        %246 = vmatpush1.xpose.msra.mxu0 0.0
        %247 = vmatprep.subr.mxu0 0.0
        %248 = vmatpush1.xpose.msra.mxu0 0.0
        %249 = vmatprep.subr.mxu0 0.0
        %250 = vmatpush1.xpose.msra.mxu0 0.0
        %251 = vmatprep.subr.mxu0 0.0
        %252 = vmatpush1.xpose.msra.mxu0 0.0
        %253 = vmatprep.subr.mxu0 0.0
        %254 = vmatpush1.xpose.msra.mxu0 0.0
        %255 = vmatprep.subr.mxu0 0.0
        %256 = vmatpush1.xpose.msra.mxu0 0.0
        %257 = vmatprep.subr.mxu0 0.0
        %258 = vmatpush1.xpose.msra.mxu0 0.0
        %259 = vmatprep.subr.mxu0 0.0
        %260 = vmatpush1.xpose.msra.mxu0 0.0
        %261 = vmatprep.subr.mxu0 0.0
        %262 = vmatpush1.xpose.msra.mxu0 0.0
        %263 = vmatprep.subr.mxu0 0.0
        %264 = vmatpush1.xpose.msra.mxu0 0.0
        %265 = vmatprep.subr.mxu0 0.0
        %266 = vmatpush1.xpose.msra.mxu0 0.0
        %267 = vmatprep.subr.mxu0 0.0
        %268 = vmatpush1.xpose.msra.mxu0 0.0
        %269 = vmatprep.mubr.f32.mxu0 0.0
        %270 = vmatmul.mubr.f32.gmra.mrb[0].mxu0 %v203
        %v271 = vpop.f32.mrb[0].mxu0
        %v272 = vadd.f32 0.0, %v271
        %v273 = vpop.f32.mrb[0].mxu0
        %274 = vdwg.mxu0
        %vm275 = vcmask 3072
        %276 = vst.msk [vmem:[%s194] sm:$0xf] %vm275, %v200
        %vm277 = vcmask 27648
        %278 = vst.msk [vmem:[%s187] sm:$0xf] %vm277, %v272
        %p279 = scmp.lt.s32.totalorder %s24, 1
        %s280 = scalar_select %p279, %s24, 1
        %p281 = scmp.lt.s32.totalorder %s25, 0
        %s282 = scalar_select %p281, %s25, 0
        %s283 = sadd.s32 %s282, %s280
        %s284 = smul.addr %s283, 4
        %s285 = scalar_lea.vmem %s1, %s284
        %s286 = sand.u32 %s98, 1
        %s287 = scalar_lea.sflag [#allocation4], %s286
        %s288 = sand.u32 %s98, 1
        %s289 = smul.addr %s288, 4
        %s290 = scalar_lea.vmem [#allocation5], %s289
        // Predicated region
        $region29: #{tpu_custom_call.1} parent=23 // pred_check
          %p291 = pneg %p80
        $region30: #{tpu_custom_call.1} parent=23 // pred_check_branch
          %293 = sbr.rel (%p291) target = $region32
        $region31: #{tpu_custom_call.1} parent=23 // pred_region
          _
        $region32: #{tpu_custom_call.1} parent=23 // pred_fallthru
          _
        // Predicated region
        $region33: #{tpu_custom_call.1} parent=23 // pred_check
          %p294 = pneg %p108
        $region34: #{tpu_custom_call.1} parent=23 // pred_check_branch
          %296 = sbr.rel (%p294) target = $region36
        $region35: #{tpu_custom_call.1} parent=23 // pred_region
          %s298 = ssub.s32 64, 64
          %299 = vsyncadd %s287, %s298
          %s300 = sadd.s32 %s25, %s24
          %s301 = smul.addr %s300, 64
          %s302 = scalar_lea.hbm %s2, %s301
          %s304 = sshll.u32 %s290, 4
          %s305 = int_to_ptr.vmem [resolvable:$true] %s304
          %307 = dma.vmem_to_hbm [thread:$0]  %s305, 64, %s302, %s287
        $region36: #{tpu_custom_call.1} parent=23 // pred_fallthru
          _
      $region24: #{tpu_custom_call.1} parent=5 // pred_fallthru
        _
      %p308 = scmp.le.s32.totalorder 2, %s15
      // Predicated region
      $region37: #{tpu_custom_call.1} parent=5 // pred_check
        %p309 = pneg %p308
      $region38: #{tpu_custom_call.1} parent=5 // pred_check_branch
        %311 = sbr.rel (%p309) target = $region40
      $region39: #{tpu_custom_call.1} parent=5 // pred_region
        %s312 = ssub.s32 %s15, 2
        // Predicated region
        $region41: #{tpu_custom_call.1} parent=39 // pred_check
          %p313 = pneg %p86
        $region42: #{tpu_custom_call.1} parent=39 // pred_check_branch
          %315 = sbr.rel (%p313) target = $region44
        $region43: #{tpu_custom_call.1} parent=39 // pred_region
          %p316 = scmp.lt.s32.totalorder %s26, 1
          %s317 = scalar_select %p316, %s26, 1
          %p318 = scmp.lt.s32.totalorder %s27, 0
          %s319 = scalar_select %p318, %s27, 0
          %s320 = sadd.s32 %s319, %s317
          %s321 = smul.addr %s320, 4
          %s322 = scalar_lea.vmem %s1, %s321
        $region44: #{tpu_custom_call.1} parent=39 // pred_fallthru
          _
        // Predicated region
        $region45: #{tpu_custom_call.1} parent=39 // pred_check
          %p323 = pneg %p114
        $region46: #{tpu_custom_call.1} parent=39 // pred_check_branch
          %325 = sbr.rel (%p323) target = $region48
        $region47: #{tpu_custom_call.1} parent=39 // pred_region
          %s326 = sand.u32 %s99, 1
          %s327 = scalar_lea.sflag [#allocation4], %s326
          %s328 = sand.u32 %s99, 1
          %s329 = smul.addr %s328, 4
          %s330 = scalar_lea.vmem [#allocation5], %s329
          %331 = dma.done %s327, 64
        $region48: #{tpu_custom_call.1} parent=39 // pred_fallthru
          _
      $region40: #{tpu_custom_call.1} parent=5 // pred_fallthru
        _
    $region6: #{tpu_custom_call.1} parent=1 // loop_footer
      %s19 = sadd.s32 1, %s15
    $region7: #{tpu_custom_call.1} parent=1 // loop_footer_branch
      %14 = sbr.rel target = $region3
    $region8: #{tpu_custom_call.1} parent=1 // loop_exit
      _
    %332 = vsyncpa [#allocation3], 1
    %s333 = scalar_lea.sflag [#allocation3], 1
    %334 = vsyncpa %s333, 1
    %335 = vsyncpa [#allocation4], 1
    %s336 = scalar_lea.sflag [#allocation4], 1
    %337 = vsyncpa %s336, 1

</llo_original>
